<compile_context>
chip_gen: v7x
topology: tpu7x:2x2x1
jax: 0.10.0
libtpu: 0.0.40
codegen_flags: <defaults>
</compile_context>

<pallas_src>
import functools
import math

import jax
import jax.numpy as jnp
import numpy as np
from jax.experimental import pallas as pl
from jax.experimental.pallas import tpu as pltpu

EPS = 1e-8


def _content_addressing_kernel(mem_ref, keys_ref, betas_ref, *rest, mask_min,
                               has_mask, flat_out, approx_softmax, dot_precision):
    if has_mask:
        mask_ref, out_ref = rest
    else:
        (out_ref,) = rest

    memory = mem_ref[...]                        # [Bt, N, W]
    keys = keys_ref[...]                         # [Bt, H, W]
    bt, n_cells, _ = mem_ref.shape
    n_heads = keys_ref.shape[1]

    # betas is resident as the full (B_pad, H) array; slice this step's rows.
    row0 = pl.program_id(0) * bt
    betas = betas_ref[pl.ds(row0, bt), :]        # [Bt, H]

    dn = (((2,), (2,)), ((0,), (0,)))            # contract W, batch over Bt

    if has_mask:
        mask = mask_ref[...]                     # [Bt, H, W]
        if mask_min != 0.0:
            mask = mask * (1.0 - mask_min) + mask_min
        mask_sq = mask * mask                    # computed once, reused 3x

        # scores_raw[b,h,n] = sum_w memory*keys*mask^2
        scores_raw = jax.lax.dot_general(
            keys * mask_sq, memory, dn,
            precision=dot_precision, preferred_element_type=jnp.float32)   # [Bt,H,N]
        # ||masked memory||[b,h,n]
        mem_norm = jnp.sqrt(jax.lax.dot_general(
            mask_sq, memory * memory, dn,
            precision=dot_precision, preferred_element_type=jnp.float32))  # [Bt,H,N]
        # ||masked keys||[b,h]
        key_norm = jnp.sqrt(
            jnp.sum(keys * keys * mask_sq, axis=-1, keepdims=True))        # [Bt,H,1]
    else:
        # Mask-free specialization: no mask DMA, one dot_general, and the memory
        # norm is a single reduce over W broadcast across heads.
        scores_raw = jax.lax.dot_general(
            keys, memory, dn,
            precision=dot_precision, preferred_element_type=jnp.float32)   # [Bt,H,N]
        mem_norm = jnp.sqrt(jnp.sum(memory * memory, axis=-1))[:, None, :]  # [Bt,1,N]
        key_norm = jnp.sqrt(jnp.sum(keys * keys, axis=-1, keepdims=True))   # [Bt,H,1]

    # cosine similarity; betas folded into the normalization scale (exact recip —
    # the tight-tolerance path goes through it).
    scale = betas[:, :, None] * pl.reciprocal(key_norm * mem_norm + EPS,
                                              approx=False)                # [Bt,H,N]
    scores = scores_raw * scale

    # numerically-stable softmax over cells; denominator reciprocal on the EUP.
    m = jnp.max(scores, axis=-1, keepdims=True)
    e = jnp.exp(scores - m)
    inv_denom = pl.reciprocal(jnp.sum(e, axis=-1, keepdims=True),
                              approx=approx_softmax)
    weights = (e * inv_denom).astype(out_ref.dtype)                        # [Bt,H,N]

    # Single full-block store (no unrolled per-row stores).
    if flat_out:
        out_ref[...] = weights.reshape(bt * n_heads, n_cells)
    else:
        out_ref[...] = weights


def _vmem_limit_bytes():
    """Generation-aware scoped-VMEM limit (48 MiB on v7x, 64 MiB on v5e/v6e)."""
    default = 32 * 1024 * 1024
    try:
        info = pltpu.get_tpu_info()
        cap = int(getattr(info, "vmem_capacity_bytes", 0) or 0)
    except Exception:
        return default
    if cap <= 0:
        return default
    if cap <= 64 * 1024 * 1024:          # v7x: 64 MiB physical per TensorCore
        return min(48 * 1024 * 1024, cap * 3 // 4)
    return 64 * 1024 * 1024              # v5e / v6e: 128 MiB physical


def _pick_block_batch(B, H, N, W, has_mask, flat_out, vmem_limit_bytes):
    """Batch elements per grid step: big HBM-friendly blocks, VMEM-bounded,
    >= 2 grid steps when B allows (v7x megacore), 8-row aligned flat output."""
    align = (8 // math.gcd(H, 8)) if flat_out else 1
    # Bytes streamed per batch element per step (f32).
    stream_b = (N * W + (2 if has_mask else 1) * H * W + H * N) * 4
    # Rough resident bytes: double-buffered streams + fp32 temps (memory^2,
    # scores / norms / weights).
    resident_b = 2 * stream_b + (N * W + 3 * H * N + H * W) * 4
    target = 6 * 1024 * 1024
    budget = int(vmem_limit_bytes * 0.6)
    bt = max(1, min(target // stream_b, budget // max(resident_b, 1)))
    bt = min(bt, B)
    if B >= 2 * align:                   # keep >= 2 parallel grid steps
        bt = min(bt, -(-B // 2))
    bt = max(align, bt - bt % align)
    if B % bt != 0:                      # prefer an exact divisor (no batch padding)
        for cand in range(bt, max(align, bt // 2) - 1, -align):
            if B % cand == 0:
                bt = cand
                break
    return bt


def content_addressing(memory, keys, betas, mask=None, mask_min=0.0,
                       approx_softmax=True, dot_precision=None):
    """Pallas version of ContentAddressing.forward."""
    memory = jnp.asarray(memory, jnp.float32)
    keys = jnp.asarray(keys, jnp.float32)
    betas = jnp.asarray(betas, jnp.float32)

    single_head = keys.ndim == 2
    if single_head:
        keys = keys[:, None, :]
        if mask is not None:
            mask = mask[:, None, :]

    B, N, W = memory.shape
    H = keys.shape[1]
    has_mask = mask is not None

    # betas -> [B, H] (2-D, H on lanes; avoids a degenerate lane-1 block).
    betas = betas.reshape(B, -1)
    if betas.shape[1] == 1 and H > 1:
        betas = jnp.broadcast_to(betas, (B, H))
    if has_mask:
        mask = jnp.asarray(mask, jnp.float32)

    vmem_limit = _vmem_limit_bytes()
    flat_out = (H == 1) or (H % 8 == 0)          # flattened (B*H, N) output layout
    bt = _pick_block_batch(B, H, N, W, has_mask, flat_out, vmem_limit)
    grid_b = pl.cdiv(B, bt)
    B_pad = grid_b * bt

    if B_pad != B:                               # ragged batch -> pad (rows sliced off)
        pad = B_pad - B
        memory = jnp.pad(memory, ((0, pad), (0, 0), (0, 0)))
        keys = jnp.pad(keys, ((0, pad), (0, 0), (0, 0)))
        betas = jnp.pad(betas, ((0, pad), (0, 0)))
        if has_mask:
            mask = jnp.pad(mask, ((0, pad), (0, 0), (0, 0)))

    kernel = functools.partial(
        _content_addressing_kernel,
        mask_min=float(mask_min), has_mask=has_mask, flat_out=flat_out,
        approx_softmax=approx_softmax, dot_precision=dot_precision)

    in_specs = [
        pl.BlockSpec((bt, N, W), lambda b: (b, 0, 0)),   # memory (dominant stream)
        pl.BlockSpec((bt, H, W), lambda b: (b, 0, 0)),   # keys
        pl.BlockSpec((B_pad, H), lambda b: (0, 0)),      # betas: resident, fetched once
    ]
    inputs = [memory, keys, betas]
    if has_mask:
        in_specs.append(pl.BlockSpec((bt, H, W), lambda b: (b, 0, 0)))
        inputs.append(mask)

    if flat_out:
        out_shape = jax.ShapeDtypeStruct((B_pad * H, N), jnp.float32)
        out_spec = pl.BlockSpec((bt * H, N), lambda b: (b, 0))
    else:
        out_shape = jax.ShapeDtypeStruct((B_pad, H, N), jnp.float32)
        out_spec = pl.BlockSpec((bt, H, N), lambda b: (b, 0, 0))

    out = pl.pallas_call(
        kernel,
        out_shape=out_shape,
        grid=(grid_b,),
        in_specs=in_specs,
        out_specs=out_spec,
        compiler_params=pltpu.CompilerParams(
            dimension_semantics=("parallel",),
            vmem_limit_bytes=vmem_limit,
        ),
    )(*inputs)

    out = out.reshape(B_pad, H, N)[:B]
    return out[:, 0, :] if single_head else out


def _reference(memory, keys, betas, mask, mask_min):
    """Pure-JAX reference mirroring the PyTorch forward exactly."""
    mask = mask * (1.0 - mask_min) + mask_min          # [B, H, W]
    mem = memory[:, None, :, :]                        # [B, 1, N, W]
    k = keys[:, :, None, :]                            # [B, H, 1, W]
    msk = mask[:, :, None, :]                          # [B, H, 1, W]
    mem = mem * msk
    k = k * msk
    norm = jnp.linalg.norm(k, axis=-1) * jnp.linalg.norm(mem, axis=-1)  # [B,H,N]
    scores = (mem * k).sum(-1) / (norm + EPS)          # [B, H, N]
    scores = scores * betas                            # betas [B, H, 1]
    return jax.nn.softmax(scores, axis=-1)


if __name__ == "__main__":
    key = jax.random.PRNGKey(0)
    k1, k2, k3, k4, k5, k6, k7 = jax.random.split(key, 7)

    # --- multi-head, masked path (2-step grid, 3-D output block, exact recip) ---
    B, H, N, W = 8, 4, 16, 32
    mask_min = 0.1
    memory = jax.random.normal(k1, (B, N, W), jnp.float32)
    keys = jax.random.normal(k2, (B, H, W), jnp.float32)
    betas = jax.random.uniform(k3, (B, H, 1), jnp.float32, 0.5, 2.0)
    mask = jax.random.uniform(k4, (B, H, W), jnp.float32)

    ref = _reference(memory, keys, betas, mask, mask_min)

    out = jax.block_until_ready(content_addressing(
        memory, keys, betas, mask, mask_min=mask_min, approx_softmax=False))
    np.testing.assert_allclose(np.asarray(out), np.asarray(ref),
                               rtol=1e-5, atol=1e-5)
    assert out.shape == (B, H, N)

    # same inputs through the production default (EUP approx softmax reciprocal)
    out_approx = jax.block_until_ready(content_addressing(
        memory, keys, betas, mask, mask_min=mask_min))
    np.testing.assert_allclose(np.asarray(out_approx), np.asarray(ref),
                               rtol=1e-2, atol=1e-2)

    # --- single-head, no-mask path (mask-free kernel, flat output, padded batch) ---
    B1 = 5
    memory1 = jax.random.normal(k5, (B1, N, W), jnp.float32)
    keys1 = jax.random.normal(k6, (B1, W), jnp.float32)
    betas1 = jax.random.uniform(k7, (B1, 1), jnp.float32, 0.5, 2.0)
    out1 = jax.block_until_ready(content_addressing(
        memory1, keys1, betas1, mask=None, approx_softmax=False))
    ref1 = _reference(memory1, keys1[:, None, :], betas1[:, :, None],
                      jnp.ones((B1, 1, W), jnp.float32), 0.0)[:, 0, :]
    np.testing.assert_allclose(np.asarray(out1), np.asarray(ref1),
                               rtol=1e-5, atol=1e-5)
    assert out1.shape == (B1, N)

    print("KERNEL_OK")
</pallas_src>

<mosaic_0001>
module attributes {stable_mosaic.version = 11 : i64} {
  func.func @_content_addressing_kernel(%arg0: i32, %arg1: memref<4x16x32xf32, #tpu.memory_space<vmem>>, %arg2: memref<4x4x32xf32, #tpu.memory_space<vmem>>, %arg3: memref<8x4xf32, #tpu.memory_space<vmem>>, %arg4: memref<4x4x32xf32, #tpu.memory_space<vmem>>, %arg5: memref<4x4x16xf32, #tpu.memory_space<vmem>>) attributes {dimension_semantics = [#tpu.dimension_semantics<parallel>], iteration_bounds = array<i64: 2>, scalar_prefetch = 0 : i64, scratch_operands = 0 : i64, tpu.core_type = #tpu.core_type<tc>, window_params = [{transform_indices = @transform_0, window_bounds = array<i64: 4, 16, 32>}, {transform_indices = @transform_1, window_bounds = array<i64: 4, 4, 32>}, {pipeline_mode = #tpu.pipeline_mode<synchronous>, transform_indices = @transform_2, window_bounds = array<i64: 8, 4>}, {transform_indices = @transform_3, window_bounds = array<i64: 4, 4, 32>}, {transform_indices = @transform_4, window_bounds = array<i64: 4, 4, 16>}]} {
    %c0 = arith.constant 0 : index
    %c0_0 = arith.constant 0 : index
    %c0_1 = arith.constant 0 : index
    %0 = vector.load %arg1[%c0, %c0_0, %c0_1] : memref<4x16x32xf32, #tpu.memory_space<vmem>>, vector<4x16x32xf32>
    %c0_2 = arith.constant 0 : index
    %c0_3 = arith.constant 0 : index
    %c0_4 = arith.constant 0 : index
    %1 = vector.load %arg2[%c0_2, %c0_3, %c0_4] : memref<4x4x32xf32, #tpu.memory_space<vmem>>, vector<4x4x32xf32>
    %c4_i32 = arith.constant 4 : i32
    %2 = arith.muli %arg0, %c4_i32 : i32
    %3 = arith.index_cast %2 : i32 to index
    %c0_5 = arith.constant 0 : index
    %4 = vector.load %arg3[%3, %c0_5] : memref<8x4xf32, #tpu.memory_space<vmem>>, vector<4x4xf32>
    %c0_6 = arith.constant 0 : index
    %c0_7 = arith.constant 0 : index
    %c0_8 = arith.constant 0 : index
    %5 = vector.load %arg4[%c0_6, %c0_7, %c0_8] : memref<4x4x32xf32, #tpu.memory_space<vmem>>, vector<4x4x32xf32>
    %cst = arith.constant 0.899999976 : f32
    %6 = vector.broadcast %cst : f32 to vector<4x4x32xf32>
    %7 = arith.mulf %5, %6 : vector<4x4x32xf32>
    %cst_9 = arith.constant 1.000000e-01 : f32
    %8 = vector.broadcast %cst_9 : f32 to vector<4x4x32xf32>
    %9 = arith.addf %7, %8 : vector<4x4x32xf32>
    %10 = arith.mulf %9, %9 : vector<4x4x32xf32>
    %11 = arith.mulf %1, %10 : vector<4x4x32xf32>
    %cst_10 = arith.constant dense<0.000000e+00> : vector<4x4x16xf32>
    %12 = tpu.matmul %11, %0, %cst_10 {dimension_numbers = #tpu.dot_dimension_numbers<[2], [2], [1], [1], [0, 0, 0, 1, 1, 1], [0], [0]>} : vector<4x4x32xf32>, vector<4x16x32xf32>, vector<4x4x16xf32> -> vector<4x4x16xf32>
    %13 = arith.mulf %0, %0 : vector<4x16x32xf32>
    %cst_11 = arith.constant dense<0.000000e+00> : vector<4x4x16xf32>
    %14 = tpu.matmul %10, %13, %cst_11 {dimension_numbers = #tpu.dot_dimension_numbers<[2], [2], [1], [1], [0, 0, 0, 1, 1, 1], [0], [0]>} : vector<4x4x32xf32>, vector<4x16x32xf32>, vector<4x4x16xf32> -> vector<4x4x16xf32>
    %15 = math.sqrt %14 : vector<4x4x16xf32>
    %16 = arith.mulf %1, %1 : vector<4x4x32xf32>
    %17 = arith.mulf %16, %10 : vector<4x4x32xf32>
    %cst_12 = arith.constant dense<0.000000e+00> : vector<4x4xf32>
    %18 = vector.multi_reduction <add>, %17, %cst_12 [2] : vector<4x4x32xf32> to vector<4x4xf32>
    %19 = vector.shape_cast %18 : vector<4x4xf32> to vector<4x4x1xf32>
    %20 = math.sqrt %19 : vector<4x4x1xf32>
    %21 = vector.shape_cast %4 : vector<4x4xf32> to vector<4x4x1xf32>
    %22 = vector.broadcast %20 : vector<4x4x1xf32> to vector<4x4x16xf32>
    %23 = arith.mulf %22, %15 : vector<4x4x16xf32>
    %cst_13 = arith.constant 9.99999993E-9 : f32
    %24 = vector.broadcast %cst_13 : f32 to vector<4x4x16xf32>
    %25 = arith.addf %23, %24 : vector<4x4x16xf32>
    %26 = tpu.reciprocal %25 : vector<4x4x16xf32> -> vector<4x4x16xf32>
    %27 = vector.broadcast %21 : vector<4x4x1xf32> to vector<4x4x16xf32>
    %28 = arith.mulf %27, %26 : vector<4x4x16xf32>
    %29 = arith.mulf %12, %28 : vector<4x4x16xf32>
    %cst_14 = arith.constant dense<0xFF800000> : vector<4x4xf32>
    %30 = vector.multi_reduction <maximumf>, %29, %cst_14 [2] : vector<4x4x16xf32> to vector<4x4xf32>
    %31 = vector.shape_cast %30 : vector<4x4xf32> to vector<4x4x1xf32>
    %32 = vector.broadcast %31 : vector<4x4x1xf32> to vector<4x4x16xf32>
    %33 = arith.subf %29, %32 : vector<4x4x16xf32>
    %34 = math.exp %33 : vector<4x4x16xf32>
    %cst_15 = arith.constant dense<0.000000e+00> : vector<4x4xf32>
    %35 = vector.multi_reduction <add>, %34, %cst_15 [2] : vector<4x4x16xf32> to vector<4x4xf32>
    %36 = vector.shape_cast %35 : vector<4x4xf32> to vector<4x4x1xf32>
    %37 = tpu.reciprocal %36 : vector<4x4x1xf32> -> vector<4x4x1xf32>
    %38 = vector.broadcast %37 : vector<4x4x1xf32> to vector<4x4x16xf32>
    %39 = arith.mulf %34, %38 : vector<4x4x16xf32>
    %c0_16 = arith.constant 0 : index
    %c0_17 = arith.constant 0 : index
    %c0_18 = arith.constant 0 : index
    %40 = vector.load %arg5[%c0_16, %c0_17, %c0_18] : memref<4x4x16xf32, #tpu.memory_space<vmem>>, vector<4x4x16xf32>
    tpu.vector_store %arg5[%c0_16, %c0_17, %c0_18], %39 {strides = array<i32>} : memref<4x4x16xf32, #tpu.memory_space<vmem>>, vector<4x4x16xf32>,
    return
  }
  func.func @transform_0(%arg0: i32) -> (i32, i32, i32) {
    %c0_i32 = arith.constant 0 : i32
    %c0_i32_0 = arith.constant 0 : i32
    %c0_i32_1 = arith.constant 0 : i32
    return %arg0, %c0_i32, %c0_i32_0 : i32, i32, i32
  }
  func.func @transform_1(%arg0: i32) -> (i32, i32, i32) {
    %c0_i32 = arith.constant 0 : i32
    %c0_i32_0 = arith.constant 0 : i32
    %c0_i32_1 = arith.constant 0 : i32
    return %arg0, %c0_i32, %c0_i32_0 : i32, i32, i32
  }
  func.func @transform_2(%arg0: i32) -> (i32, i32) {
    %c0_i32 = arith.constant 0 : i32
    %c0_i32_0 = arith.constant 0 : i32
    %c0_i32_1 = arith.constant 0 : i32
    return %c0_i32, %c0_i32_0 : i32, i32
  }
  func.func @transform_3(%arg0: i32) -> (i32, i32, i32) {
    %c0_i32 = arith.constant 0 : i32
    %c0_i32_0 = arith.constant 0 : i32
    %c0_i32_1 = arith.constant 0 : i32
    return %arg0, %c0_i32, %c0_i32_0 : i32, i32, i32
  }
  func.func @transform_4(%arg0: i32) -> (i32, i32, i32) {
    %c0_i32 = arith.constant 0 : i32
    %c0_i32_0 = arith.constant 0 : i32
    %c0_i32_1 = arith.constant 0 : i32
    return %arg0, %c0_i32, %c0_i32_0 : i32, i32, i32
  }
}

</mosaic_0001>

<llo_original>
// kernel: tpu_custom_call.1
$region0: #{tpu_custom_call.1}
  #allocation0 [shape = 'u32[]', space=smem, size = 0x4, offset = 0x4, fixed_abs, tag = 'smem constant byte address 0x4 - core index']
  #allocation1 [shape = 'u32[144,128]{1,0:T(1,128)}', space=vmem, size = 0x12000, scoped, tag = 'internal scratch']
  %s0 = inlined_call_operand.hbm [shape: f32[8,16,32], index: 0, kind: input, shape index: {}]
  %s1 = inlined_call_operand.hbm [shape: f32[8,4,32], index: 1, kind: input, shape index: {}]
  %s2 = inlined_call_operand.vmem [shape: f32[8,4], index: 2, kind: input, shape index: {}]
  %s3 = inlined_call_operand.hbm [shape: f32[8,4,32], index: 3, kind: input, shape index: {}]
  %s4 = inlined_call_operand.hbm [shape: f32[8,4,16], index: 4, kind: output, shape index: {}]
  %s5 = sld [smem:[#allocation0]]
  $region61: #{tpu_custom_call.1} parent=0
    _
  %s7 = ssub.s32 1, %s5
  %s8 = scalar_select 0, %s7, %s5
  $region1: #{tpu_custom_call.1} parent=0
    #allocation2 [shape = 'u8[65536]{0}', space=vmem, size = 0x10000, scoped, tag = 'input window, operand 0']
    #allocation3 [shape = 's32[2]{0}', space=sflag, size = 0x8, scoped, tag = 'scoped memory for tpu_custom_call.1']
    #allocation4 [shape = 's32[2]{0}', space=sflag, size = 0x8, scoped, tag = 'scoped memory for tpu_custom_call.1']
    #allocation5 [shape = 'u8[16384]{0}', space=vmem, size = 0x4000, scoped, tag = 'input window, operand 1']
    #allocation6 [shape = 's32[2]{0}', space=sflag, size = 0x8, scoped, tag = 'scoped memory for tpu_custom_call.1']
    #allocation7 [shape = 'u8[16384]{0}', space=vmem, size = 0x4000, scoped, tag = 'input window, operand 3']
    #allocation8 [shape = 'u8[16384]{0}', space=vmem, size = 0x4000, scoped, tag = 'output window, operand 0']
    %9 = vsyncpa [#allocation3], 0
    %s10 = scalar_lea.sflag [#allocation3], 1
    %11 = vsyncpa %s10, 0
    %12 = vsyncpa [#allocation6], 0
    %s13 = scalar_lea.sflag [#allocation6], 1
    %14 = vsyncpa %s13, 0
    %15 = vsyncpa [#allocation4], 0
    %s16 = scalar_lea.sflag [#allocation4], 1
    %17 = vsyncpa %s16, 0
    loop: start=0, step=1, limit=4
    $region2: #{tpu_custom_call.1} parent=1 // loop_pre_header
      _
    $region3: #{tpu_custom_call.1} parent=1 // loop_header
      %s19 = sphi 0, %s23
      %p20 = scmp.ge.s32.totalorder %s19, 4
      %s29 = sphi 0, %s31
      %s32 = sphi 0, %s29
      %s33 = sphi 0, %s32
      %s49 = sphi 0, %s33
      %s55 = sphi 0, %s57
      %s58 = sphi 0, %s55
      %s59 = sphi 0, %s58
      %s75 = sphi 0, %s59
      %s79 = sphi 0, %s79
      %s81 = sphi 0, %s79
      %s82 = sphi 0, %s81
      %s96 = sphi 0, %s82
      %s102 = sphi 0, %s104
      %s105 = sphi 0, %s102
      %s106 = sphi 0, %s105
      %s122 = sphi 0, %s106
      %s128 = sphi 0, %s130
      %s131 = sphi 0, %s128
      %s132 = sphi 0, %s131
      %s148 = sphi 0, %s132
    $region4: #{tpu_custom_call.1} parent=1 // loop_header_branch
      %22 = sbr.rel (%p20) target = $region8
    $region5: #{tpu_custom_call.1} parent=1 // loop_body
      %s24 = ssub.s32 %s19, 1
      %s25 = ssub.s32 %s19, 2
      %s26 = sadd.s32 %s19, 1
      %s27 = ssub.s32 %s19, %s26
      %p28 = scmp.eq.s32.totalorder %s27, 0
      %s30 = sadd.s32 %s29, 1
      %s31 = scalar_select %p28, %s29, %s30
      %p34 = pneg %p28
      %p35 = scmp.eq.s32.totalorder %s19, 1
      %p36 = por %p34, %p35
      %p37 = scmp.ne.s32.totalorder %s29, %s32
      %p38 = scmp.eq.s32.totalorder %s19, 0
      %p39 = por %p37, %p38
      %p40 = scmp.ne.s32.totalorder %s29, %s32
      %p41 = scmp.eq.s32.totalorder %s24, 1
      %p42 = por %p40, %p41
      %p43 = scmp.ne.s32.totalorder %s32, %s33
      %p44 = scmp.eq.s32.totalorder %s24, 0
      %p45 = por %p43, %p44
      %p46 = scmp.ne.s32.totalorder %s32, %s33
      %p47 = scmp.eq.s32.totalorder %s25, 1
      %p48 = por %p46, %p47
      %p50 = scmp.ne.s32.totalorder %s33, %s49
      %p51 = scmp.eq.s32.totalorder %s25, 0
      %p52 = por %p50, %p51
      %s53 = ssub.s32 %s19, %s26
      %p54 = scmp.eq.s32.totalorder %s53, 0
      %s56 = sadd.s32 %s55, 1
      %s57 = scalar_select %p54, %s55, %s56
      %p60 = pneg %p54
      %p61 = scmp.eq.s32.totalorder %s19, 1
      %p62 = por %p60, %p61
      %p63 = scmp.ne.s32.totalorder %s55, %s58
      %p64 = scmp.eq.s32.totalorder %s19, 0
      %p65 = por %p63, %p64
      %p66 = scmp.ne.s32.totalorder %s55, %s58
      %p67 = scmp.eq.s32.totalorder %s24, 1
      %p68 = por %p66, %p67
      %p69 = scmp.ne.s32.totalorder %s58, %s59
      %p70 = scmp.eq.s32.totalorder %s24, 0
      %p71 = por %p69, %p70
      %p72 = scmp.ne.s32.totalorder %s58, %s59
      %p73 = scmp.eq.s32.totalorder %s25, 1
      %p74 = por %p72, %p73
      %p76 = scmp.ne.s32.totalorder %s59, %s75
      %p77 = scmp.eq.s32.totalorder %s25, 0
      %p78 = por %p76, %p77
      %s80 = sadd.s32 %s79, 1
      %p83 = scmp.eq.s32.totalorder %s19, 1
      %p84 = scmp.ne.s32.totalorder %s79, %s81
      %p85 = scmp.eq.s32.totalorder %s19, 0
      %p86 = por %p84, %p85
      %p87 = scmp.ne.s32.totalorder %s79, %s81
      %p88 = scmp.eq.s32.totalorder %s24, 1
      %p89 = por %p87, %p88
      %p90 = scmp.ne.s32.totalorder %s81, %s82
      %p91 = scmp.eq.s32.totalorder %s24, 0
      %p92 = por %p90, %p91
      %p93 = scmp.ne.s32.totalorder %s81, %s82
      %p94 = scmp.eq.s32.totalorder %s25, 1
      %p95 = por %p93, %p94
      %p97 = scmp.ne.s32.totalorder %s82, %s96
      %p98 = scmp.eq.s32.totalorder %s25, 0
      %p99 = por %p97, %p98
      %s100 = ssub.s32 %s19, %s26
      %p101 = scmp.eq.s32.totalorder %s100, 0
      %s103 = sadd.s32 %s102, 1
      %s104 = scalar_select %p101, %s102, %s103
      %p107 = pneg %p101
      %p108 = scmp.eq.s32.totalorder %s19, 1
      %p109 = por %p107, %p108
      %p110 = scmp.ne.s32.totalorder %s102, %s105
      %p111 = scmp.eq.s32.totalorder %s19, 0
      %p112 = por %p110, %p111
      %p113 = scmp.ne.s32.totalorder %s102, %s105
      %p114 = scmp.eq.s32.totalorder %s24, 1
      %p115 = por %p113, %p114
      %p116 = scmp.ne.s32.totalorder %s105, %s106
      %p117 = scmp.eq.s32.totalorder %s24, 0
      %p118 = por %p116, %p117
      %p119 = scmp.ne.s32.totalorder %s105, %s106
      %p120 = scmp.eq.s32.totalorder %s25, 1
      %p121 = por %p119, %p120
      %p123 = scmp.ne.s32.totalorder %s106, %s122
      %p124 = scmp.eq.s32.totalorder %s25, 0
      %p125 = por %p123, %p124
      %s126 = ssub.s32 %s19, %s26
      %p127 = scmp.eq.s32.totalorder %s126, 0
      %s129 = sadd.s32 %s128, 1
      %s130 = scalar_select %p127, %s128, %s129
      %p133 = pneg %p127
      %p134 = scmp.eq.s32.totalorder %s19, 1
      %p135 = por %p133, %p134
      %p136 = scmp.ne.s32.totalorder %s128, %s131
      %p137 = scmp.eq.s32.totalorder %s19, 0
      %p138 = por %p136, %p137
      %p139 = scmp.ne.s32.totalorder %s128, %s131
      %p140 = scmp.eq.s32.totalorder %s24, 1
      %p141 = por %p139, %p140
      %p142 = scmp.ne.s32.totalorder %s131, %s132
      %p143 = scmp.eq.s32.totalorder %s24, 0
      %p144 = por %p142, %p143
      %p145 = scmp.ne.s32.totalorder %s131, %s132
      %p146 = scmp.eq.s32.totalorder %s25, 1
      %p147 = por %p145, %p146
      %p149 = scmp.ne.s32.totalorder %s132, %s148
      %p150 = scmp.eq.s32.totalorder %s25, 0
      %p151 = por %p149, %p150
      %p152 = scmp.le.s32.totalorder 1, %s19
      %p153 = scmp.lt.s32.totalorder %s19, 3
      %p154 = pnand %p152, %p153
      %p155 = pneg %p154
      // Predicated region
      $region9: #{tpu_custom_call.1} parent=5 // pred_check
        _
      $region10: #{tpu_custom_call.1} parent=5 // pred_check_branch
        %157 = sbr.rel (%p154) target = $region12
      $region11: #{tpu_custom_call.1} parent=5 // pred_region
        %s158 = ssub.s32 %s19, 1
        // Predicated region
        $region13: #{tpu_custom_call.1} parent=11 // pred_check
          %p159 = pneg %p92
        $region14: #{tpu_custom_call.1} parent=11 // pred_check_branch
          %161 = sbr.rel (%p159) target = $region16
        $region15: #{tpu_custom_call.1} parent=11 // pred_region
          _
        $region16: #{tpu_custom_call.1} parent=11 // pred_fallthru
          _
      $region12: #{tpu_custom_call.1} parent=5 // pred_fallthru
        _
      %p162 = scmp.lt.s32.totalorder %s19, 2
      // Predicated region
      $region17: #{tpu_custom_call.1} parent=5 // pred_check
        %p163 = pneg %p162
      $region18: #{tpu_custom_call.1} parent=5 // pred_check_branch
        %165 = sbr.rel (%p163) target = $region20
      $region19: #{tpu_custom_call.1} parent=5 // pred_region
        // Predicated region
        $region21: #{tpu_custom_call.1} parent=19 // pred_check
          %p166 = pneg %p39
        $region22: #{tpu_custom_call.1} parent=19 // pred_check_branch
          %168 = sbr.rel (%p166) target = $region24
        $region23: #{tpu_custom_call.1} parent=19 // pred_region
          %s169 = sand.u32 %s29, 1
          %s170 = scalar_lea.sflag [#allocation3], %s169
          %s171 = sand.u32 %s29, 1
          %s172 = smul.addr %s171, 64
          %s173 = scalar_lea.vmem [#allocation2], %s172
          %s174 = smul.u32 4, %s19
          %s176 = ssub.s32 1024, 1024
          %177 = vsyncadd %s170, %s176
          %s178 = smul.addr %s174, 2
          %s179 = smul.addr %s178, 128
          %s180 = scalar_lea.hbm %s0, %s179
          %s181 = sshll.u32 %s173, 4
          %s182 = int_to_ptr.vmem [resolvable:$true] %s181
          %187 = dma.hbm_to_vmem [thread:$0]  %s180, 1024, %s182, %s170, 128, 128, 8
        $region24: #{tpu_custom_call.1} parent=19 // pred_fallthru
          _
        // Predicated region
        $region25: #{tpu_custom_call.1} parent=19 // pred_check
          %p188 = pneg %p65
        $region26: #{tpu_custom_call.1} parent=19 // pred_check_branch
          %190 = sbr.rel (%p188) target = $region28
        $region27: #{tpu_custom_call.1} parent=19 // pred_region
          %s191 = sand.u32 %s19, 1
          %s192 = scalar_lea.sflag [#allocation6], %s191
          %s193 = sand.u32 %s55, 1
          %s194 = smul.addr %s193, 16
          %s195 = scalar_lea.vmem [#allocation5], %s194
          %s196 = smul.u32 4, %s19
          %s198 = ssub.s32 256, 256
          %199 = vsyncadd %s192, %s198
          %s200 = smul.addr %s196, 64
          %s201 = scalar_lea.hbm %s1, %s200
          %s202 = sshll.u32 %s195, 4
          %s203 = int_to_ptr.vmem [resolvable:$true] %s202
          %208 = dma.hbm_to_vmem [thread:$0]  %s201, 256, %s203, %s192, 64, 64, 4
        $region28: #{tpu_custom_call.1} parent=19 // pred_fallthru
          _
        // Predicated region
        $region29: #{tpu_custom_call.1} parent=19 // pred_check
          %p209 = pneg %p112
        $region30: #{tpu_custom_call.1} parent=19 // pred_check_branch
          %211 = sbr.rel (%p209) target = $region32
        $region31: #{tpu_custom_call.1} parent=19 // pred_region
          %s212 = sand.u32 %s19, 1
          %s213 = scalar_lea.sflag [#allocation6], %s212
          %s214 = sand.u32 %s102, 1
          %s215 = smul.addr %s214, 16
          %s216 = scalar_lea.vmem [#allocation7], %s215
          %s217 = smul.u32 4, %s19
          %s219 = ssub.s32 256, 256
          %220 = vsyncadd %s213, %s219
          %s221 = smul.addr %s217, 64
          %s222 = scalar_lea.hbm %s3, %s221
          %s223 = sshll.u32 %s216, 4
          %s224 = int_to_ptr.vmem [resolvable:$true] %s223
          %229 = dma.hbm_to_vmem [thread:$0]  %s222, 256, %s224, %s213, 64, 64, 4
        $region32: #{tpu_custom_call.1} parent=19 // pred_fallthru
          _
      $region20: #{tpu_custom_call.1} parent=5 // pred_fallthru
        _
      %p230 = scmp.le.s32.totalorder 1, %s19
      %p231 = scmp.lt.s32.totalorder %s19, 3
      %p232 = pnand %p230, %p231
      %p233 = pneg %p232
      // Predicated region
      $region33: #{tpu_custom_call.1} parent=5 // pred_check
        _
      $region34: #{tpu_custom_call.1} parent=5 // pred_check_branch
        %235 = sbr.rel (%p232) target = $region36
      $region35: #{tpu_custom_call.1} parent=5 // pred_region
        %s236 = ssub.s32 %s19, 1
        %s237 = sand.u32 %s32, 1
        %s238 = scalar_lea.sflag [#allocation3], %s237
        %s239 = sand.u32 %s32, 1
        %s240 = smul.addr %s239, 64
        %s241 = scalar_lea.vmem [#allocation2], %s240
        // Predicated region
        $region37: #{tpu_custom_call.1} parent=35 // pred_check
          %p242 = pneg %p45
        $region38: #{tpu_custom_call.1} parent=35 // pred_check_branch
          %244 = sbr.rel (%p242) target = $region40
        $region39: #{tpu_custom_call.1} parent=35 // pred_region
          %245 = dma.done %s238, 1024
        $region40: #{tpu_custom_call.1} parent=35 // pred_fallthru
          _
        %s246 = sand.u32 %s24, 1
        %s247 = scalar_lea.sflag [#allocation6], %s246
        %s248 = sand.u32 %s58, 1
        %s249 = smul.addr %s248, 16
        %s250 = scalar_lea.vmem [#allocation5], %s249
        // Predicated region
        $region41: #{tpu_custom_call.1} parent=35 // pred_check
          %p251 = pneg %p71
        $region42: #{tpu_custom_call.1} parent=35 // pred_check_branch
          %253 = sbr.rel (%p251) target = $region44
        $region43: #{tpu_custom_call.1} parent=35 // pred_region
          %254 = dma.done %s247, 256
        $region44: #{tpu_custom_call.1} parent=35 // pred_fallthru
          _
        %s255 = sand.u32 %s24, 1
        %s256 = scalar_lea.sflag [#allocation6], %s255
        %s257 = sand.u32 %s105, 1
        %s258 = smul.addr %s257, 16
        %s259 = scalar_lea.vmem [#allocation7], %s258
        // Predicated region
        $region45: #{tpu_custom_call.1} parent=35 // pred_check
          %p260 = pneg %p118
        $region46: #{tpu_custom_call.1} parent=35 // pred_check_branch
          %262 = sbr.rel (%p260) target = $region48
        $region47: #{tpu_custom_call.1} parent=35 // pred_region
          %263 = dma.done %s256, 256
        $region48: #{tpu_custom_call.1} parent=35 // pred_fallthru
          _
        %s264 = sand.u32 %s32, 1
        %s265 = scalar_lea.sflag [#allocation3], %s264
        %s266 = sand.u32 %s32, 1
        %s267 = smul.addr %s266, 64
        %s268 = scalar_lea.vmem [#allocation2], %s267
        %p269 = pneg %p45
        %p270 = pneg %p42
        %s271 = sand.u32 %s24, 1
        %s272 = scalar_lea.sflag [#allocation6], %s271
        %s273 = sand.u32 %s58, 1
        %s274 = smul.addr %s273, 16
        %s275 = scalar_lea.vmem [#allocation5], %s274
        %p276 = pneg %p71
        %p277 = pneg %p68
        %p278 = pneg %p92
        %p279 = pneg %p89
        %s280 = sand.u32 %s24, 1
        %s281 = scalar_lea.sflag [#allocation6], %s280
        %s282 = sand.u32 %s105, 1
        %s283 = smul.addr %s282, 16
        %s284 = scalar_lea.vmem [#allocation7], %s283
        %p285 = pneg %p118
        %p286 = pneg %p115
        %p287 = pneg %p144
        %p288 = pneg %p141
        %s289 = sand.u32 %s131, 1
        %s290 = scalar_lea.sflag [#allocation4], %s289
        %s291 = sand.u32 %s131, 1
        %s292 = smul.addr %s291, 16
        %s293 = scalar_lea.vmem [#allocation8], %s292
        %s294 = smul.u32 4, %s24
        %s295 = smul.u32 4, %s24
        %s296 = smul.u32 4, %s24
        %s297 = smul.u32 4, %s24
        %v298 = vld [vmem:[%s241] sm:$0xff]
        %v299 = vld [vmem:[%s241 + $0x8] sm:$0xff]
        %v300 = vld [vmem:[%s241 + $0x10] sm:$0xff]
        %v301 = vld [vmem:[%s241 + $0x18] sm:$0xff]
        %v302 = vld [vmem:[%s241 + $0x20] sm:$0xff]
        %v303 = vld [vmem:[%s241 + $0x28] sm:$0xff]
        %v304 = vld [vmem:[%s241 + $0x30] sm:$0xff]
        %v305 = vld [vmem:[%s241 + $0x38] sm:$0xff]
        %v306 = vld [vmem:[%s250] sm:$0xf]
        %v307 = vld [vmem:[%s250 + $0x4] sm:$0xf]
        %v308 = vld [vmem:[%s250 + $0x8] sm:$0xf]
        %v309 = vld [vmem:[%s250 + $0xc] sm:$0xf]
        %s310 = smul.u32 %s24, 4
        %s311 = scalar_lea.vmem %s2, %s310
        %v312 = vld [vmem:[%s311] sm:$0xf]
        %v313 = vld [vmem:[%s259] sm:$0xf]
        %v314 = vld [vmem:[%s259 + $0x4] sm:$0xf]
        %v315 = vld [vmem:[%s259 + $0x8] sm:$0xf]
        %v316 = vld [vmem:[%s259 + $0xc] sm:$0xf]
        %v317 = vmul.f32 %v313, 0.9
        %v318 = vmul.f32 %v314, 0.9
        %v319 = vmul.f32 %v315, 0.9
        %v320 = vmul.f32 %v316, 0.9
        %v321 = vadd.f32 %v317, 0.1
        %v322 = vadd.f32 %v318, 0.1
        %v323 = vadd.f32 %v319, 0.1
        %v324 = vadd.f32 %v320, 0.1
        %v325 = vmul.f32 %v321, %v321
        %v326 = vmul.f32 %v322, %v322
        %v327 = vmul.f32 %v323, %v323
        %v328 = vmul.f32 %v324, %v324
        %v329 = vmul.f32 %v306, %v325
        %v330 = vmul.f32 %v307, %v326
        %v331 = vmul.f32 %v308, %v327
        %v332 = vmul.f32 %v309, %v328
        %vm333 = vcmask 261120
        %v335 = vsel %vm333, %v329, 0
        %v338 = vsel %vm333, %v298, 0
        %v341 = vsel %vm333, %v299, 0
        %343 = vmatprep.subr.mxu0 0.0
        %344 = vmatpush1.xpose.msra.mxu0 %v338
        %345 = vmatprep.subr.mxu0 0.0
        %346 = vmatpush1.xpose.msra.mxu0 %v341
        %347 = vmatprep.subr.mxu0 0.0
        %348 = vmatpush1.xpose.msra.mxu0 0.0
        %349 = vmatprep.subr.mxu0 0.0
        %350 = vmatpush1.xpose.msra.mxu0 0.0
        %351 = vmatprep.subr.mxu0 0.0
        %352 = vmatpush1.xpose.msra.mxu0 0.0
        %353 = vmatprep.subr.mxu0 0.0
        %354 = vmatpush1.xpose.msra.mxu0 0.0
        %355 = vmatprep.subr.mxu0 0.0
        %356 = vmatpush1.xpose.msra.mxu0 0.0
        %357 = vmatprep.subr.mxu0 0.0
        %358 = vmatpush1.xpose.msra.mxu0 0.0
        %359 = vmatprep.subr.mxu0 0.0
        %360 = vmatpush1.xpose.msra.mxu0 0.0
        %361 = vmatprep.subr.mxu0 0.0
        %362 = vmatpush1.xpose.msra.mxu0 0.0
        %363 = vmatprep.subr.mxu0 0.0
        %364 = vmatpush1.xpose.msra.mxu0 0.0
        %365 = vmatprep.subr.mxu0 0.0
        %366 = vmatpush1.xpose.msra.mxu0 0.0
        %367 = vmatprep.subr.mxu0 0.0
        %368 = vmatpush1.xpose.msra.mxu0 0.0
        %369 = vmatprep.subr.mxu0 0.0
        %370 = vmatpush1.xpose.msra.mxu0 0.0
        %371 = vmatprep.subr.mxu0 0.0
        %372 = vmatpush1.xpose.msra.mxu0 0.0
        %373 = vmatprep.subr.mxu0 0.0
        %374 = vmatpush1.xpose.msra.mxu0 0.0
        %375 = vmatprep.subr.mxu0 0.0
        %376 = vmatpush1.xpose.msra.mxu0 0.0
        %377 = vmatprep.subr.mxu0 0.0
        %378 = vmatpush1.xpose.msra.mxu0 0.0
        %379 = vmatprep.subr.mxu0 0.0
        %380 = vmatpush1.xpose.msra.mxu0 0.0
        %381 = vmatprep.subr.mxu0 0.0
        %382 = vmatpush1.xpose.msra.mxu0 0.0
        %383 = vmatprep.subr.mxu0 0.0
        %384 = vmatpush1.xpose.msra.mxu0 0.0
        %385 = vmatprep.subr.mxu0 0.0
        %386 = vmatpush1.xpose.msra.mxu0 0.0
        %387 = vmatprep.subr.mxu0 0.0
        %388 = vmatpush1.xpose.msra.mxu0 0.0
        %389 = vmatprep.subr.mxu0 0.0
        %390 = vmatpush1.xpose.msra.mxu0 0.0
        %391 = vmatprep.subr.mxu0 0.0
        %392 = vmatpush1.xpose.msra.mxu0 0.0
        %393 = vmatprep.subr.mxu0 0.0
        %394 = vmatpush1.xpose.msra.mxu0 0.0
        %395 = vmatprep.subr.mxu0 0.0
        %396 = vmatpush1.xpose.msra.mxu0 0.0
        %397 = vmatprep.subr.mxu0 0.0
        %398 = vmatpush1.xpose.msra.mxu0 0.0
        %399 = vmatprep.subr.mxu0 0.0
        %400 = vmatpush1.xpose.msra.mxu0 0.0
        %401 = vmatprep.subr.mxu0 0.0
        %402 = vmatpush1.xpose.msra.mxu0 0.0
        %403 = vmatprep.subr.mxu0 0.0
        %404 = vmatpush1.xpose.msra.mxu0 0.0
        %405 = vmatprep.subr.mxu0 0.0
        %406 = vmatpush1.xpose.msra.mxu0 0.0
        %407 = vmatprep.mubr.f32.mxu0 0.0
        %408 = vmatmul.mubr.f32.gmra.mrb[0].mxu0 %v335
        %v409 = vpop.f32.mrb[0].mxu0
        %v410 = vadd.f32 0.0, %v409
        %v411 = vpop.f32.mrb[0].mxu0
        %412 = vdwg.mxu0
        %v414 = vsel %vm333, %v330, 0
        %v417 = vsel %vm333, %v300, 0
        %v420 = vsel %vm333, %v301, 0
        %422 = vmatprep.subr.mxu0 0.0
        %423 = vmatpush1.xpose.msra.mxu0 %v417
        %424 = vmatprep.subr.mxu0 0.0
        %425 = vmatpush1.xpose.msra.mxu0 %v420
        %426 = vmatprep.subr.mxu0 0.0
        %427 = vmatpush1.xpose.msra.mxu0 0.0
        %428 = vmatprep.subr.mxu0 0.0
        %429 = vmatpush1.xpose.msra.mxu0 0.0
        %430 = vmatprep.subr.mxu0 0.0
        %431 = vmatpush1.xpose.msra.mxu0 0.0
        %432 = vmatprep.subr.mxu0 0.0
        %433 = vmatpush1.xpose.msra.mxu0 0.0
        %434 = vmatprep.subr.mxu0 0.0
        %435 = vmatpush1.xpose.msra.mxu0 0.0
        %436 = vmatprep.subr.mxu0 0.0
        %437 = vmatpush1.xpose.msra.mxu0 0.0
        %438 = vmatprep.subr.mxu0 0.0
        %439 = vmatpush1.xpose.msra.mxu0 0.0
        %440 = vmatprep.subr.mxu0 0.0
        %441 = vmatpush1.xpose.msra.mxu0 0.0
        %442 = vmatprep.subr.mxu0 0.0
        %443 = vmatpush1.xpose.msra.mxu0 0.0
        %444 = vmatprep.subr.mxu0 0.0
        %445 = vmatpush1.xpose.msra.mxu0 0.0
        %446 = vmatprep.subr.mxu0 0.0
        %447 = vmatpush1.xpose.msra.mxu0 0.0
        %448 = vmatprep.subr.mxu0 0.0
        %449 = vmatpush1.xpose.msra.mxu0 0.0
        %450 = vmatprep.subr.mxu0 0.0
        %451 = vmatpush1.xpose.msra.mxu0 0.0
        %452 = vmatprep.subr.mxu0 0.0
        %453 = vmatpush1.xpose.msra.mxu0 0.0
        %454 = vmatprep.subr.mxu0 0.0
        %455 = vmatpush1.xpose.msra.mxu0 0.0
        %456 = vmatprep.subr.mxu0 0.0
        %457 = vmatpush1.xpose.msra.mxu0 0.0
        %458 = vmatprep.subr.mxu0 0.0
        %459 = vmatpush1.xpose.msra.mxu0 0.0
        %460 = vmatprep.subr.mxu0 0.0
        %461 = vmatpush1.xpose.msra.mxu0 0.0
        %462 = vmatprep.subr.mxu0 0.0
        %463 = vmatpush1.xpose.msra.mxu0 0.0
        %464 = vmatprep.subr.mxu0 0.0
        %465 = vmatpush1.xpose.msra.mxu0 0.0
        %466 = vmatprep.subr.mxu0 0.0
        %467 = vmatpush1.xpose.msra.mxu0 0.0
        %468 = vmatprep.subr.mxu0 0.0
        %469 = vmatpush1.xpose.msra.mxu0 0.0
        %470 = vmatprep.subr.mxu0 0.0
        %471 = vmatpush1.xpose.msra.mxu0 0.0
        %472 = vmatprep.subr.mxu0 0.0
        %473 = vmatpush1.xpose.msra.mxu0 0.0
        %474 = vmatprep.subr.mxu0 0.0
        %475 = vmatpush1.xpose.msra.mxu0 0.0
        %476 = vmatprep.subr.mxu0 0.0
        %477 = vmatpush1.xpose.msra.mxu0 0.0
        %478 = vmatprep.subr.mxu0 0.0
        %479 = vmatpush1.xpose.msra.mxu0 0.0
        %480 = vmatprep.subr.mxu0 0.0
        %481 = vmatpush1.xpose.msra.mxu0 0.0
        %482 = vmatprep.subr.mxu0 0.0
        %483 = vmatpush1.xpose.msra.mxu0 0.0
        %484 = vmatprep.subr.mxu0 0.0
        %485 = vmatpush1.xpose.msra.mxu0 0.0
        %486 = vmatprep.mubr.f32.mxu0 0.0
        %487 = vmatmul.mubr.f32.gmra.mrb[0].mxu0 %v414
        %v488 = vpop.f32.mrb[0].mxu0
        %v489 = vadd.f32 0.0, %v488
        %v490 = vpop.f32.mrb[0].mxu0
        %491 = vdwg.mxu0
        %v493 = vsel %vm333, %v331, 0
        %v496 = vsel %vm333, %v302, 0
        %v499 = vsel %vm333, %v303, 0
        %501 = vmatprep.subr.mxu0 0.0
        %502 = vmatpush1.xpose.msra.mxu0 %v496
        %503 = vmatprep.subr.mxu0 0.0
        %504 = vmatpush1.xpose.msra.mxu0 %v499
        %505 = vmatprep.subr.mxu0 0.0
        %506 = vmatpush1.xpose.msra.mxu0 0.0
        %507 = vmatprep.subr.mxu0 0.0
        %508 = vmatpush1.xpose.msra.mxu0 0.0
        %509 = vmatprep.subr.mxu0 0.0
        %510 = vmatpush1.xpose.msra.mxu0 0.0
        %511 = vmatprep.subr.mxu0 0.0
        %512 = vmatpush1.xpose.msra.mxu0 0.0
        %513 = vmatprep.subr.mxu0 0.0
        %514 = vmatpush1.xpose.msra.mxu0 0.0
        %515 = vmatprep.subr.mxu0 0.0
        %516 = vmatpush1.xpose.msra.mxu0 0.0
        %517 = vmatprep.subr.mxu0 0.0
        %518 = vmatpush1.xpose.msra.mxu0 0.0
        %519 = vmatprep.subr.mxu0 0.0
        %520 = vmatpush1.xpose.msra.mxu0 0.0
        %521 = vmatprep.subr.mxu0 0.0
        %522 = vmatpush1.xpose.msra.mxu0 0.0
        %523 = vmatprep.subr.mxu0 0.0
        %524 = vmatpush1.xpose.msra.mxu0 0.0
        %525 = vmatprep.subr.mxu0 0.0
        %526 = vmatpush1.xpose.msra.mxu0 0.0
        %527 = vmatprep.subr.mxu0 0.0
        %528 = vmatpush1.xpose.msra.mxu0 0.0
        %529 = vmatprep.subr.mxu0 0.0
        %530 = vmatpush1.xpose.msra.mxu0 0.0
        %531 = vmatprep.subr.mxu0 0.0
        %532 = vmatpush1.xpose.msra.mxu0 0.0
        %533 = vmatprep.subr.mxu0 0.0
        %534 = vmatpush1.xpose.msra.mxu0 0.0
        %535 = vmatprep.subr.mxu0 0.0
        %536 = vmatpush1.xpose.msra.mxu0 0.0
        %537 = vmatprep.subr.mxu0 0.0
        %538 = vmatpush1.xpose.msra.mxu0 0.0
        %539 = vmatprep.subr.mxu0 0.0
        %540 = vmatpush1.xpose.msra.mxu0 0.0
        %541 = vmatprep.subr.mxu0 0.0
        %542 = vmatpush1.xpose.msra.mxu0 0.0
        %543 = vmatprep.subr.mxu0 0.0
        %544 = vmatpush1.xpose.msra.mxu0 0.0
        %545 = vmatprep.subr.mxu0 0.0
        %546 = vmatpush1.xpose.msra.mxu0 0.0
        %547 = vmatprep.subr.mxu0 0.0
        %548 = vmatpush1.xpose.msra.mxu0 0.0
        %549 = vmatprep.subr.mxu0 0.0
        %550 = vmatpush1.xpose.msra.mxu0 0.0
        %551 = vmatprep.subr.mxu0 0.0
        %552 = vmatpush1.xpose.msra.mxu0 0.0
        %553 = vmatprep.subr.mxu0 0.0
        %554 = vmatpush1.xpose.msra.mxu0 0.0
        %555 = vmatprep.subr.mxu0 0.0
        %556 = vmatpush1.xpose.msra.mxu0 0.0
        %557 = vmatprep.subr.mxu0 0.0
        %558 = vmatpush1.xpose.msra.mxu0 0.0
        %559 = vmatprep.subr.mxu0 0.0
        %560 = vmatpush1.xpose.msra.mxu0 0.0
        %561 = vmatprep.subr.mxu0 0.0
        %562 = vmatpush1.xpose.msra.mxu0 0.0
        %563 = vmatprep.subr.mxu0 0.0
        %564 = vmatpush1.xpose.msra.mxu0 0.0
        %565 = vmatprep.mubr.f32.mxu0 0.0
        %566 = vmatmul.mubr.f32.gmra.mrb[0].mxu0 %v493
        %v567 = vpop.f32.mrb[0].mxu0
        %v568 = vadd.f32 0.0, %v567
        %v569 = vpop.f32.mrb[0].mxu0
        %570 = vdwg.mxu0
        %v572 = vsel %vm333, %v332, 0
        %v575 = vsel %vm333, %v304, 0
        %v578 = vsel %vm333, %v305, 0
        %580 = vmatprep.subr.mxu0 0.0
        %581 = vmatpush1.xpose.msra.mxu0 %v575
        %582 = vmatprep.subr.mxu0 0.0
        %583 = vmatpush1.xpose.msra.mxu0 %v578
        %584 = vmatprep.subr.mxu0 0.0
        %585 = vmatpush1.xpose.msra.mxu0 0.0
        %586 = vmatprep.subr.mxu0 0.0
        %587 = vmatpush1.xpose.msra.mxu0 0.0
        %588 = vmatprep.subr.mxu0 0.0
        %589 = vmatpush1.xpose.msra.mxu0 0.0
        %590 = vmatprep.subr.mxu0 0.0
        %591 = vmatpush1.xpose.msra.mxu0 0.0
        %592 = vmatprep.subr.mxu0 0.0
        %593 = vmatpush1.xpose.msra.mxu0 0.0
        %594 = vmatprep.subr.mxu0 0.0
        %595 = vmatpush1.xpose.msra.mxu0 0.0
        %596 = vmatprep.subr.mxu0 0.0
        %597 = vmatpush1.xpose.msra.mxu0 0.0
        %598 = vmatprep.subr.mxu0 0.0
        %599 = vmatpush1.xpose.msra.mxu0 0.0
        %600 = vmatprep.subr.mxu0 0.0
        %601 = vmatpush1.xpose.msra.mxu0 0.0
        %602 = vmatprep.subr.mxu0 0.0
        %603 = vmatpush1.xpose.msra.mxu0 0.0
        %604 = vmatprep.subr.mxu0 0.0
        %605 = vmatpush1.xpose.msra.mxu0 0.0
        %606 = vmatprep.subr.mxu0 0.0
        %607 = vmatpush1.xpose.msra.mxu0 0.0
        %608 = vmatprep.subr.mxu0 0.0
        %609 = vmatpush1.xpose.msra.mxu0 0.0
        %610 = vmatprep.subr.mxu0 0.0
        %611 = vmatpush1.xpose.msra.mxu0 0.0
        %612 = vmatprep.subr.mxu0 0.0
        %613 = vmatpush1.xpose.msra.mxu0 0.0
        %614 = vmatprep.subr.mxu0 0.0
        %615 = vmatpush1.xpose.msra.mxu0 0.0
        %616 = vmatprep.subr.mxu0 0.0
        %617 = vmatpush1.xpose.msra.mxu0 0.0
        %618 = vmatprep.subr.mxu0 0.0
        %619 = vmatpush1.xpose.msra.mxu0 0.0
        %620 = vmatprep.subr.mxu0 0.0
        %621 = vmatpush1.xpose.msra.mxu0 0.0
        %622 = vmatprep.subr.mxu0 0.0
        %623 = vmatpush1.xpose.msra.mxu0 0.0
        %624 = vmatprep.subr.mxu0 0.0
        %625 = vmatpush1.xpose.msra.mxu0 0.0
        %626 = vmatprep.subr.mxu0 0.0
        %627 = vmatpush1.xpose.msra.mxu0 0.0
        %628 = vmatprep.subr.mxu0 0.0
        %629 = vmatpush1.xpose.msra.mxu0 0.0
        %630 = vmatprep.subr.mxu0 0.0
        %631 = vmatpush1.xpose.msra.mxu0 0.0
        %632 = vmatprep.subr.mxu0 0.0
        %633 = vmatpush1.xpose.msra.mxu0 0.0
        %634 = vmatprep.subr.mxu0 0.0
        %635 = vmatpush1.xpose.msra.mxu0 0.0
        %636 = vmatprep.subr.mxu0 0.0
        %637 = vmatpush1.xpose.msra.mxu0 0.0
        %638 = vmatprep.subr.mxu0 0.0
        %639 = vmatpush1.xpose.msra.mxu0 0.0
        %640 = vmatprep.subr.mxu0 0.0
        %641 = vmatpush1.xpose.msra.mxu0 0.0
        %642 = vmatprep.subr.mxu0 0.0
        %643 = vmatpush1.xpose.msra.mxu0 0.0
        %644 = vmatprep.mubr.f32.mxu0 0.0
        %645 = vmatmul.mubr.f32.gmra.mrb[0].mxu0 %v572
        %v646 = vpop.f32.mrb[0].mxu0
        %v647 = vadd.f32 0.0, %v646
        %v648 = vpop.f32.mrb[0].mxu0
        %649 = vdwg.mxu0
        %v650 = vmul.f32 %v298, %v298
        %v651 = vmul.f32 %v299, %v299
        %v652 = vmul.f32 %v300, %v300
        %v653 = vmul.f32 %v301, %v301
        %v654 = vmul.f32 %v302, %v302
        %v655 = vmul.f32 %v303, %v303
        %v656 = vmul.f32 %v304, %v304
        %v657 = vmul.f32 %v305, %v305
        %v659 = vsel %vm333, %v325, 0
        %v662 = vsel %vm333, %v650, 0
        %v665 = vsel %vm333, %v651, 0
        %667 = vmatprep.subr.mxu0 0.0
        %668 = vmatpush1.xpose.msra.mxu0 %v662
        %669 = vmatprep.subr.mxu0 0.0
        %670 = vmatpush1.xpose.msra.mxu0 %v665
        %671 = vmatprep.subr.mxu0 0.0
        %672 = vmatpush1.xpose.msra.mxu0 0.0
        %673 = vmatprep.subr.mxu0 0.0
        %674 = vmatpush1.xpose.msra.mxu0 0.0
        %675 = vmatprep.subr.mxu0 0.0
        %676 = vmatpush1.xpose.msra.mxu0 0.0
        %677 = vmatprep.subr.mxu0 0.0
        %678 = vmatpush1.xpose.msra.mxu0 0.0
        %679 = vmatprep.subr.mxu0 0.0
        %680 = vmatpush1.xpose.msra.mxu0 0.0
        %681 = vmatprep.subr.mxu0 0.0
        %682 = vmatpush1.xpose.msra.mxu0 0.0
        %683 = vmatprep.subr.mxu0 0.0
        %684 = vmatpush1.xpose.msra.mxu0 0.0
        %685 = vmatprep.subr.mxu0 0.0
        %686 = vmatpush1.xpose.msra.mxu0 0.0
        %687 = vmatprep.subr.mxu0 0.0
        %688 = vmatpush1.xpose.msra.mxu0 0.0
        %689 = vmatprep.subr.mxu0 0.0
        %690 = vmatpush1.xpose.msra.mxu0 0.0
        %691 = vmatprep.subr.mxu0 0.0
        %692 = vmatpush1.xpose.msra.mxu0 0.0
        %693 = vmatprep.subr.mxu0 0.0
        %694 = vmatpush1.xpose.msra.mxu0 0.0
        %695 = vmatprep.subr.mxu0 0.0
        %696 = vmatpush1.xpose.msra.mxu0 0.0
        %697 = vmatprep.subr.mxu0 0.0
        %698 = vmatpush1.xpose.msra.mxu0 0.0
        %699 = vmatprep.subr.mxu0 0.0
        %700 = vmatpush1.xpose.msra.mxu0 0.0
        %701 = vmatprep.subr.mxu0 0.0
        %702 = vmatpush1.xpose.msra.mxu0 0.0
        %703 = vmatprep.subr.mxu0 0.0
        %704 = vmatpush1.xpose.msra.mxu0 0.0
        %705 = vmatprep.subr.mxu0 0.0
        %706 = vmatpush1.xpose.msra.mxu0 0.0
        %707 = vmatprep.subr.mxu0 0.0
        %708 = vmatpush1.xpose.msra.mxu0 0.0
        %709 = vmatprep.subr.mxu0 0.0
        %710 = vmatpush1.xpose.msra.mxu0 0.0
        %711 = vmatprep.subr.mxu0 0.0
        %712 = vmatpush1.xpose.msra.mxu0 0.0
        %713 = vmatprep.subr.mxu0 0.0
        %714 = vmatpush1.xpose.msra.mxu0 0.0
        %715 = vmatprep.subr.mxu0 0.0
        %716 = vmatpush1.xpose.msra.mxu0 0.0
        %717 = vmatprep.subr.mxu0 0.0
        %718 = vmatpush1.xpose.msra.mxu0 0.0
        %719 = vmatprep.subr.mxu0 0.0
        %720 = vmatpush1.xpose.msra.mxu0 0.0
        %721 = vmatprep.subr.mxu0 0.0
        %722 = vmatpush1.xpose.msra.mxu0 0.0
        %723 = vmatprep.subr.mxu0 0.0
        %724 = vmatpush1.xpose.msra.mxu0 0.0
        %725 = vmatprep.subr.mxu0 0.0
        %726 = vmatpush1.xpose.msra.mxu0 0.0
        %727 = vmatprep.subr.mxu0 0.0
        %728 = vmatpush1.xpose.msra.mxu0 0.0
        %729 = vmatprep.subr.mxu0 0.0
        %730 = vmatpush1.xpose.msra.mxu0 0.0
        %731 = vmatprep.mubr.f32.mxu0 0.0
        %732 = vmatmul.mubr.f32.gmra.mrb[0].mxu0 %v659
        %v733 = vpop.f32.mrb[0].mxu0
        %v734 = vadd.f32 0.0, %v733
        %v735 = vpop.f32.mrb[0].mxu0
        %736 = vdwg.mxu0
        %v738 = vsel %vm333, %v326, 0
        %v741 = vsel %vm333, %v652, 0
        %v744 = vsel %vm333, %v653, 0
        %746 = vmatprep.subr.mxu0 0.0
        %747 = vmatpush1.xpose.msra.mxu0 %v741
        %748 = vmatprep.subr.mxu0 0.0
        %749 = vmatpush1.xpose.msra.mxu0 %v744
        %750 = vmatprep.subr.mxu0 0.0
        %751 = vmatpush1.xpose.msra.mxu0 0.0
        %752 = vmatprep.subr.mxu0 0.0
        %753 = vmatpush1.xpose.msra.mxu0 0.0
        %754 = vmatprep.subr.mxu0 0.0
        %755 = vmatpush1.xpose.msra.mxu0 0.0
        %756 = vmatprep.subr.mxu0 0.0
        %757 = vmatpush1.xpose.msra.mxu0 0.0
        %758 = vmatprep.subr.mxu0 0.0
        %759 = vmatpush1.xpose.msra.mxu0 0.0
        %760 = vmatprep.subr.mxu0 0.0
        %761 = vmatpush1.xpose.msra.mxu0 0.0
        %762 = vmatprep.subr.mxu0 0.0
        %763 = vmatpush1.xpose.msra.mxu0 0.0
        %764 = vmatprep.subr.mxu0 0.0
        %765 = vmatpush1.xpose.msra.mxu0 0.0
        %766 = vmatprep.subr.mxu0 0.0
        %767 = vmatpush1.xpose.msra.mxu0 0.0
        %768 = vmatprep.subr.mxu0 0.0
        %769 = vmatpush1.xpose.msra.mxu0 0.0
        %770 = vmatprep.subr.mxu0 0.0
        %771 = vmatpush1.xpose.msra.mxu0 0.0
        %772 = vmatprep.subr.mxu0 0.0
        %773 = vmatpush1.xpose.msra.mxu0 0.0
        %774 = vmatprep.subr.mxu0 0.0
        %775 = vmatpush1.xpose.msra.mxu0 0.0
        %776 = vmatprep.subr.mxu0 0.0
        %777 = vmatpush1.xpose.msra.mxu0 0.0
        %778 = vmatprep.subr.mxu0 0.0
        %779 = vmatpush1.xpose.msra.mxu0 0.0
        %780 = vmatprep.subr.mxu0 0.0
        %781 = vmatpush1.xpose.msra.mxu0 0.0
        %782 = vmatprep.subr.mxu0 0.0
        %783 = vmatpush1.xpose.msra.mxu0 0.0
        %784 = vmatprep.subr.mxu0 0.0
        %785 = vmatpush1.xpose.msra.mxu0 0.0
        %786 = vmatprep.subr.mxu0 0.0
        %787 = vmatpush1.xpose.msra.mxu0 0.0
        %788 = vmatprep.subr.mxu0 0.0
        %789 = vmatpush1.xpose.msra.mxu0 0.0
        %790 = vmatprep.subr.mxu0 0.0
        %791 = vmatpush1.xpose.msra.mxu0 0.0
        %792 = vmatprep.subr.mxu0 0.0
        %793 = vmatpush1.xpose.msra.mxu0 0.0
        %794 = vmatprep.subr.mxu0 0.0
        %795 = vmatpush1.xpose.msra.mxu0 0.0
        %796 = vmatprep.subr.mxu0 0.0
        %797 = vmatpush1.xpose.msra.mxu0 0.0
        %798 = vmatprep.subr.mxu0 0.0
        %799 = vmatpush1.xpose.msra.mxu0 0.0
        %800 = vmatprep.subr.mxu0 0.0
        %801 = vmatpush1.xpose.msra.mxu0 0.0
        %802 = vmatprep.subr.mxu0 0.0
        %803 = vmatpush1.xpose.msra.mxu0 0.0
        %804 = vmatprep.subr.mxu0 0.0
        %805 = vmatpush1.xpose.msra.mxu0 0.0
        %806 = vmatprep.subr.mxu0 0.0
        %807 = vmatpush1.xpose.msra.mxu0 0.0
        %808 = vmatprep.subr.mxu0 0.0
        %809 = vmatpush1.xpose.msra.mxu0 0.0
        %810 = vmatprep.mubr.f32.mxu0 0.0
        %811 = vmatmul.mubr.f32.gmra.mrb[0].mxu0 %v738
        %v812 = vpop.f32.mrb[0].mxu0
        %v813 = vadd.f32 0.0, %v812
        %v814 = vpop.f32.mrb[0].mxu0
        %815 = vdwg.mxu0
        %v817 = vsel %vm333, %v327, 0
        %v820 = vsel %vm333, %v654, 0
        %v823 = vsel %vm333, %v655, 0
        %825 = vmatprep.subr.mxu0 0.0
        %826 = vmatpush1.xpose.msra.mxu0 %v820
        %827 = vmatprep.subr.mxu0 0.0
        %828 = vmatpush1.xpose.msra.mxu0 %v823
        %829 = vmatprep.subr.mxu0 0.0
        %830 = vmatpush1.xpose.msra.mxu0 0.0
        %831 = vmatprep.subr.mxu0 0.0
        %832 = vmatpush1.xpose.msra.mxu0 0.0
        %833 = vmatprep.subr.mxu0 0.0
        %834 = vmatpush1.xpose.msra.mxu0 0.0
        %835 = vmatprep.subr.mxu0 0.0
        %836 = vmatpush1.xpose.msra.mxu0 0.0
        %837 = vmatprep.subr.mxu0 0.0
        %838 = vmatpush1.xpose.msra.mxu0 0.0
        %839 = vmatprep.subr.mxu0 0.0
        %840 = vmatpush1.xpose.msra.mxu0 0.0
        %841 = vmatprep.subr.mxu0 0.0
        %842 = vmatpush1.xpose.msra.mxu0 0.0
        %843 = vmatprep.subr.mxu0 0.0
        %844 = vmatpush1.xpose.msra.mxu0 0.0
        %845 = vmatprep.subr.mxu0 0.0
        %846 = vmatpush1.xpose.msra.mxu0 0.0
        %847 = vmatprep.subr.mxu0 0.0
        %848 = vmatpush1.xpose.msra.mxu0 0.0
        %849 = vmatprep.subr.mxu0 0.0
        %850 = vmatpush1.xpose.msra.mxu0 0.0
        %851 = vmatprep.subr.mxu0 0.0
        %852 = vmatpush1.xpose.msra.mxu0 0.0
        %853 = vmatprep.subr.mxu0 0.0
        %854 = vmatpush1.xpose.msra.mxu0 0.0
        %855 = vmatprep.subr.mxu0 0.0
        %856 = vmatpush1.xpose.msra.mxu0 0.0
        %857 = vmatprep.subr.mxu0 0.0
        %858 = vmatpush1.xpose.msra.mxu0 0.0
        %859 = vmatprep.subr.mxu0 0.0
        %860 = vmatpush1.xpose.msra.mxu0 0.0
        %861 = vmatprep.subr.mxu0 0.0
        %862 = vmatpush1.xpose.msra.mxu0 0.0
        %863 = vmatprep.subr.mxu0 0.0
        %864 = vmatpush1.xpose.msra.mxu0 0.0
        %865 = vmatprep.subr.mxu0 0.0
        %866 = vmatpush1.xpose.msra.mxu0 0.0
        %867 = vmatprep.subr.mxu0 0.0
        %868 = vmatpush1.xpose.msra.mxu0 0.0
        %869 = vmatprep.subr.mxu0 0.0
        %870 = vmatpush1.xpose.msra.mxu0 0.0
        %871 = vmatprep.subr.mxu0 0.0
        %872 = vmatpush1.xpose.msra.mxu0 0.0
        %873 = vmatprep.subr.mxu0 0.0
        %874 = vmatpush1.xpose.msra.mxu0 0.0
        %875 = vmatprep.subr.mxu0 0.0
        %876 = vmatpush1.xpose.msra.mxu0 0.0
        %877 = vmatprep.subr.mxu0 0.0
        %878 = vmatpush1.xpose.msra.mxu0 0.0
        %879 = vmatprep.subr.mxu0 0.0
        %880 = vmatpush1.xpose.msra.mxu0 0.0
        %881 = vmatprep.subr.mxu0 0.0
        %882 = vmatpush1.xpose.msra.mxu0 0.0
        %883 = vmatprep.subr.mxu0 0.0
        %884 = vmatpush1.xpose.msra.mxu0 0.0
        %885 = vmatprep.subr.mxu0 0.0
        %886 = vmatpush1.xpose.msra.mxu0 0.0
        %887 = vmatprep.subr.mxu0 0.0
        %888 = vmatpush1.xpose.msra.mxu0 0.0
        %889 = vmatprep.mubr.f32.mxu0 0.0
        %890 = vmatmul.mubr.f32.gmra.mrb[0].mxu0 %v817
        %v891 = vpop.f32.mrb[0].mxu0
        %v892 = vadd.f32 0.0, %v891
        %v893 = vpop.f32.mrb[0].mxu0
        %894 = vdwg.mxu0
        %v896 = vsel %vm333, %v328, 0
        %v899 = vsel %vm333, %v656, 0
        %v902 = vsel %vm333, %v657, 0
        %904 = vmatprep.subr.mxu0 0.0
        %905 = vmatpush1.xpose.msra.mxu0 %v899
        %906 = vmatprep.subr.mxu0 0.0
        %907 = vmatpush1.xpose.msra.mxu0 %v902
        %908 = vmatprep.subr.mxu0 0.0
        %909 = vmatpush1.xpose.msra.mxu0 0.0
        %910 = vmatprep.subr.mxu0 0.0
        %911 = vmatpush1.xpose.msra.mxu0 0.0
        %912 = vmatprep.subr.mxu0 0.0
        %913 = vmatpush1.xpose.msra.mxu0 0.0
        %914 = vmatprep.subr.mxu0 0.0
        %915 = vmatpush1.xpose.msra.mxu0 0.0
        %916 = vmatprep.subr.mxu0 0.0
        %917 = vmatpush1.xpose.msra.mxu0 0.0
        %918 = vmatprep.subr.mxu0 0.0
        %919 = vmatpush1.xpose.msra.mxu0 0.0
        %920 = vmatprep.subr.mxu0 0.0
        %921 = vmatpush1.xpose.msra.mxu0 0.0
        %922 = vmatprep.subr.mxu0 0.0
        %923 = vmatpush1.xpose.msra.mxu0 0.0
        %924 = vmatprep.subr.mxu0 0.0
        %925 = vmatpush1.xpose.msra.mxu0 0.0
        %926 = vmatprep.subr.mxu0 0.0
        %927 = vmatpush1.xpose.msra.mxu0 0.0
        %928 = vmatprep.subr.mxu0 0.0
        %929 = vmatpush1.xpose.msra.mxu0 0.0
        %930 = vmatprep.subr.mxu0 0.0
        %931 = vmatpush1.xpose.msra.mxu0 0.0
        %932 = vmatprep.subr.mxu0 0.0
        %933 = vmatpush1.xpose.msra.mxu0 0.0
        %934 = vmatprep.subr.mxu0 0.0
        %935 = vmatpush1.xpose.msra.mxu0 0.0
        %936 = vmatprep.subr.mxu0 0.0
        %937 = vmatpush1.xpose.msra.mxu0 0.0
        %938 = vmatprep.subr.mxu0 0.0
        %939 = vmatpush1.xpose.msra.mxu0 0.0
        %940 = vmatprep.subr.mxu0 0.0
        %941 = vmatpush1.xpose.msra.mxu0 0.0
        %942 = vmatprep.subr.mxu0 0.0
        %943 = vmatpush1.xpose.msra.mxu0 0.0
        %944 = vmatprep.subr.mxu0 0.0
        %945 = vmatpush1.xpose.msra.mxu0 0.0
        %946 = vmatprep.subr.mxu0 0.0
        %947 = vmatpush1.xpose.msra.mxu0 0.0
        %948 = vmatprep.subr.mxu0 0.0
        %949 = vmatpush1.xpose.msra.mxu0 0.0
        %950 = vmatprep.subr.mxu0 0.0
        %951 = vmatpush1.xpose.msra.mxu0 0.0
        %952 = vmatprep.subr.mxu0 0.0
        %953 = vmatpush1.xpose.msra.mxu0 0.0
        %954 = vmatprep.subr.mxu0 0.0
        %955 = vmatpush1.xpose.msra.mxu0 0.0
        %956 = vmatprep.subr.mxu0 0.0
        %957 = vmatpush1.xpose.msra.mxu0 0.0
        %958 = vmatprep.subr.mxu0 0.0
        %959 = vmatpush1.xpose.msra.mxu0 0.0
        %960 = vmatprep.subr.mxu0 0.0
        %961 = vmatpush1.xpose.msra.mxu0 0.0
        %962 = vmatprep.subr.mxu0 0.0
        %963 = vmatpush1.xpose.msra.mxu0 0.0
        %964 = vmatprep.subr.mxu0 0.0
        %965 = vmatpush1.xpose.msra.mxu0 0.0
        %966 = vmatprep.subr.mxu0 0.0
        %967 = vmatpush1.xpose.msra.mxu0 0.0
        %968 = vmatprep.mubr.f32.mxu0 0.0
        %969 = vmatmul.mubr.f32.gmra.mrb[0].mxu0 %v896
        %v970 = vpop.f32.mrb[0].mxu0
        %v971 = vadd.f32 0.0, %v970
        %v972 = vpop.f32.mrb[0].mxu0
        %973 = vdwg.mxu0
        %v974 = vrsqrt.pop %v734
        %v975 = vmul.f32 %v734, %v974
        %vm976 = vcmp.eq.f32.partialorder %v734, inf
        %v977 = vsel %vm976, %v734, %v975
        %vm978 = vcmp.eq.f32.partialorder %v734, 0.0
        %v979 = vand.u32 %v734, 2147483648
        %v980 = vsel %vm978, %v979, %v977
        %v981 = vrsqrt.pop %v813
        %v982 = vmul.f32 %v813, %v981
        %vm983 = vcmp.eq.f32.partialorder %v813, inf
        %v984 = vsel %vm983, %v813, %v982
        %vm985 = vcmp.eq.f32.partialorder %v813, 0.0
        %v986 = vand.u32 %v813, 2147483648
        %v987 = vsel %vm985, %v986, %v984
        %v988 = vrsqrt.pop %v892
        %v989 = vmul.f32 %v892, %v988
        %vm990 = vcmp.eq.f32.partialorder %v892, inf
        %v991 = vsel %vm990, %v892, %v989
        %vm992 = vcmp.eq.f32.partialorder %v892, 0.0
        %v993 = vand.u32 %v892, 2147483648
        %v994 = vsel %vm992, %v993, %v991
        %v995 = vrsqrt.pop %v971
        %v996 = vmul.f32 %v971, %v995
        %vm997 = vcmp.eq.f32.partialorder %v971, inf
        %v998 = vsel %vm997, %v971, %v996
        %vm999 = vcmp.eq.f32.partialorder %v971, 0.0
        %v1000 = vand.u32 %v971, 2147483648
        %v1001 = vsel %vm999, %v1000, %v998
        %v1002 = vmul.f32 %v306, %v306
        %v1003 = vmul.f32 %v307, %v307
        %v1004 = vmul.f32 %v308, %v308
        %v1005 = vmul.f32 %v309, %v309
        %v1006 = vmul.f32 %v1002, %v325
        %v1007 = vmul.f32 %v1003, %v326
        %v1008 = vmul.f32 %v1004, %v327
        %v1009 = vmul.f32 %v1005, %v328
        %vm1010 = vcmask 257024
        %v1011 = vsel %vm1010, %v1006, 0.0
        %1012 = vadd.xlane.f32.xlu0 %v1011
        %v1013 = vpop.xlane.xlu0 %1012
        %v1014 = vsel %vm1010, %v1007, 0.0
        %1015 = vadd.xlane.f32.xlu0 %v1014
        %v1016 = vpop.xlane.xlu0 %1015
        %v1017 = vsel %vm1010, %v1008, 0.0
        %1018 = vadd.xlane.f32.xlu0 %v1017
        %v1019 = vpop.xlane.xlu0 %1018
        %v1020 = vsel %vm1010, %v1009, 0.0
        %1021 = vadd.xlane.f32.xlu0 %v1020
        %v1022 = vpop.xlane.xlu0 %1021
        %v1023 = vrsqrt.pop %v1013
        %v1024 = vmul.f32 %v1013, %v1023
        %vm1025 = vcmp.eq.f32.partialorder %v1013, inf
        %v1026 = vsel %vm1025, %v1013, %v1024
        %vm1027 = vcmp.eq.f32.partialorder %v1013, 0.0
        %v1028 = vand.u32 %v1013, 2147483648
        %v1029 = vsel %vm1027, %v1028, %v1026
        %v1030 = vrsqrt.pop %v1016
        %v1031 = vmul.f32 %v1016, %v1030
        %vm1032 = vcmp.eq.f32.partialorder %v1016, inf
        %v1033 = vsel %vm1032, %v1016, %v1031
        %vm1034 = vcmp.eq.f32.partialorder %v1016, 0.0
        %v1035 = vand.u32 %v1016, 2147483648
        %v1036 = vsel %vm1034, %v1035, %v1033
        %v1037 = vrsqrt.pop %v1019
        %v1038 = vmul.f32 %v1019, %v1037
        %vm1039 = vcmp.eq.f32.partialorder %v1019, inf
        %v1040 = vsel %vm1039, %v1019, %v1038
        %vm1041 = vcmp.eq.f32.partialorder %v1019, 0.0
        %v1042 = vand.u32 %v1019, 2147483648
        %v1043 = vsel %vm1041, %v1042, %v1040
        %v1044 = vrsqrt.pop %v1022
        %v1045 = vmul.f32 %v1022, %v1044
        %vm1046 = vcmp.eq.f32.partialorder %v1022, inf
        %v1047 = vsel %vm1046, %v1022, %v1045
        %vm1048 = vcmp.eq.f32.partialorder %v1022, 0.0
        %v1049 = vand.u32 %v1022, 2147483648
        %v1050 = vsel %vm1048, %v1049, %v1047
        %v1051 = vlaneseq
        %v1052 = vshrl.u32 %v1051, 7
        %v1053 = vsub.s32 0, %v1052
        %v1054 = vrot.slane %v312, %v1053
        %1056 = vbcast.lane.b32.xlu0 %v1054, 256
        %v1057 = vpop.permute.xlu0 %1056
        %v1058 = vlaneseq
        %v1059 = vshrl.u32 %v1058, 7
        %v1060 = vsub.s32 1, %v1059
        %v1061 = vrot.slane %v312, %v1060
        %1063 = vbcast.lane.b32.xlu0 %v1061, 256
        %v1064 = vpop.permute.xlu0 %1063
        %v1065 = vlaneseq
        %v1066 = vshrl.u32 %v1065, 7
        %v1067 = vsub.s32 2, %v1066
        %v1068 = vrot.slane %v312, %v1067
        %1070 = vbcast.lane.b32.xlu0 %v1068, 256
        %v1071 = vpop.permute.xlu0 %1070
        %v1072 = vlaneseq
        %v1073 = vshrl.u32 %v1072, 7
        %v1074 = vsub.s32 3, %v1073
        %v1075 = vrot.slane %v312, %v1074
        %1077 = vbcast.lane.b32.xlu0 %v1075, 256
        %v1078 = vpop.permute.xlu0 %1077
        %v1079 = vmul.f32 %v1029, %v980
        %v1080 = vmul.f32 %v1036, %v987
        %v1081 = vmul.f32 %v1043, %v994
        %v1082 = vmul.f32 %v1050, %v1001
        %v1083 = vadd.f32 %v1079, 1e-08
        %v1084 = vadd.f32 %v1080, 1e-08
        %v1085 = vadd.f32 %v1081, 1e-08
        %v1086 = vadd.f32 %v1082, 1e-08
        %v1087 = vrcp.pop %v1083
        %v1088 = vrcp.pop %v1084
        %v1089 = vrcp.pop %v1085
        %v1090 = vrcp.pop %v1086
        %v1091 = vmul.f32 %v1057, %v1087
        %v1092 = vmul.f32 %v1064, %v1088
        %v1093 = vmul.f32 %v1071, %v1089
        %v1094 = vmul.f32 %v1078, %v1090
        %v1095 = vmul.f32 %v410, %v1091
        %v1096 = vmul.f32 %v489, %v1092
        %v1097 = vmul.f32 %v568, %v1093
        %v1098 = vmul.f32 %v647, %v1094
        %vm1099 = vcmask 125952
        %v1100 = vsel %vm1099, %v1095, -inf
        %1101 = vmax.xlane.f32.xlu0 %v1100
        %v1102 = vpop.xlane.xlu0 %1101
        %v1103 = vsel %vm1099, %v1096, -inf
        %1104 = vmax.xlane.f32.xlu0 %v1103
        %v1105 = vpop.xlane.xlu0 %1104
        %v1106 = vsel %vm1099, %v1097, -inf
        %1107 = vmax.xlane.f32.xlu0 %v1106
        %v1108 = vpop.xlane.xlu0 %1107
        %v1109 = vsel %vm1099, %v1098, -inf
        %1110 = vmax.xlane.f32.xlu0 %v1109
        %v1111 = vpop.xlane.xlu0 %1110
        %v1112 = vsub.f32 %v1095, %v1102
        %v1113 = vsub.f32 %v1096, %v1105
        %v1114 = vsub.f32 %v1097, %v1108
        %v1115 = vsub.f32 %v1098, %v1111
        %v1116 = vmul.f32 %v1112, 1.442695
        %v1117 = vpow.pop %v1116
        %v1118 = vmul.f32 %v1113, 1.442695
        %v1119 = vpow.pop %v1118
        %v1120 = vmul.f32 %v1114, 1.442695
        %v1121 = vpow.pop %v1120
        %v1122 = vmul.f32 %v1115, 1.442695
        %v1123 = vpow.pop %v1122
        %v1124 = vsel %vm1099, %v1117, 0.0
        %1125 = vadd.xlane.f32.xlu0 %v1124
        %v1126 = vpop.xlane.xlu0 %1125
        %v1127 = vsel %vm1099, %v1119, 0.0
        %1128 = vadd.xlane.f32.xlu0 %v1127
        %v1129 = vpop.xlane.xlu0 %1128
        %v1130 = vsel %vm1099, %v1121, 0.0
        %1131 = vadd.xlane.f32.xlu0 %v1130
        %v1132 = vpop.xlane.xlu0 %1131
        %v1133 = vsel %vm1099, %v1123, 0.0
        %1134 = vadd.xlane.f32.xlu0 %v1133
        %v1135 = vpop.xlane.xlu0 %1134
        %v1136 = vrcp.pop %v1126
        %v1137 = vrcp.pop %v1129
        %v1138 = vrcp.pop %v1132
        %v1139 = vrcp.pop %v1135
        %v1140 = vmul.f32 %v1117, %v1136
        %v1141 = vmul.f32 %v1119, %v1137
        %v1142 = vmul.f32 %v1121, %v1138
        %v1143 = vmul.f32 %v1123, %v1139
        %1144 = vst.msk [vmem:[%s293] sm:$0xf] %vm1099, %v1140
        %1145 = vst.msk [vmem:[%s293 + $0x4] sm:$0xf] %vm1099, %v1141
        %1146 = vst.msk [vmem:[%s293 + $0x8] sm:$0xf] %vm1099, %v1142
        %1147 = vst.msk [vmem:[%s293 + $0xc] sm:$0xf] %vm1099, %v1143
        %s1148 = sand.u32 %s131, 1
        %s1149 = scalar_lea.sflag [#allocation4], %s1148
        %s1150 = sand.u32 %s131, 1
        %s1151 = smul.addr %s1150, 16
        %s1152 = scalar_lea.vmem [#allocation8], %s1151
        // Predicated region
        $region49: #{tpu_custom_call.1} parent=35 // pred_check
          %p1153 = pneg %p141
        $region50: #{tpu_custom_call.1} parent=35 // pred_check_branch
          %1155 = sbr.rel (%p1153) target = $region52
        $region51: #{tpu_custom_call.1} parent=35 // pred_region
          %s1156 = smul.u32 4, %s24
          %s1158 = ssub.s32 256, 256
          %1159 = vsyncadd %s1149, %s1158
          %s1160 = smul.addr %s1156, 64
          %s1161 = scalar_lea.hbm %s4, %s1160
          %s1162 = sshll.u32 %s1152, 4
          %s1163 = int_to_ptr.vmem [resolvable:$true] %s1162
          %1168 = dma.vmem_to_hbm [thread:$0]  %s1163, 256, %s1161, %s1149, 64, 64, 4
        $region52: #{tpu_custom_call.1} parent=35 // pred_fallthru
          _
      $region36: #{tpu_custom_call.1} parent=5 // pred_fallthru
        _
      %p1169 = scmp.le.s32.totalorder 2, %s19
      // Predicated region
      $region53: #{tpu_custom_call.1} parent=5 // pred_check
        %p1170 = pneg %p1169
      $region54: #{tpu_custom_call.1} parent=5 // pred_check_branch
        %1172 = sbr.rel (%p1170) target = $region56
      $region55: #{tpu_custom_call.1} parent=5 // pred_region
        %s1173 = ssub.s32 %s19, 2
        // Predicated region
        $region57: #{tpu_custom_call.1} parent=55 // pred_check
          %p1174 = pneg %p147
        $region58: #{tpu_custom_call.1} parent=55 // pred_check_branch
          %1176 = sbr.rel (%p1174) target = $region60
        $region59: #{tpu_custom_call.1} parent=55 // pred_region
          %s1177 = sand.u32 %s132, 1
          %s1178 = scalar_lea.sflag [#allocation4], %s1177
          %s1179 = sand.u32 %s132, 1
          %s1180 = smul.addr %s1179, 16
          %s1181 = scalar_lea.vmem [#allocation8], %s1180
          %1182 = dma.done %s1178, 256
        $region60: #{tpu_custom_call.1} parent=55 // pred_fallthru
          _
      $region56: #{tpu_custom_call.1} parent=5 // pred_fallthru
        _
    $region6: #{tpu_custom_call.1} parent=1 // loop_footer
      %s23 = sadd.s32 1, %s19
    $region7: #{tpu_custom_call.1} parent=1 // loop_footer_branch
      %18 = sbr.rel target = $region3
    $region8: #{tpu_custom_call.1} parent=1 // loop_exit
      _
    %1183 = vsyncpa [#allocation3], 1
    %s1184 = scalar_lea.sflag [#allocation3], 1
    %1185 = vsyncpa %s1184, 1
    %1186 = vsyncpa [#allocation6], 1
    %s1187 = scalar_lea.sflag [#allocation6], 1
    %1188 = vsyncpa %s1187, 1
    %1189 = vsyncpa [#allocation4], 1
    %s1190 = scalar_lea.sflag [#allocation4], 1
    %1191 = vsyncpa %s1190, 1

</llo_original>
